<compile_context>
chip_gen: v7x
topology: tpu7x:2x2x1
jax: 0.10.0
libtpu: 0.0.40
codegen_flags: <defaults>
</compile_context>

<pallas_src>
import jax
import jax.numpy as jnp
from jax.experimental import pallas as pl
from jax.experimental.pallas import tpu as pltpu

LANE = 128  # TPU lane width: pad the tiny action_dim output up to this.


def _actor_kernel(x_ref, w1_ref, b1_ref, w2_ref, b2_ref, w3_ref, b3_ref,
                  out_ref):
    x = x_ref[...]                                                   # [TB, S]
    h1 = jnp.tanh(jnp.dot(x, w1_ref[...],
                          preferred_element_type=jnp.float32) + b1_ref[...])
    h2 = jnp.tanh(jnp.dot(h1, w2_ref[...],
                          preferred_element_type=jnp.float32) + b2_ref[...])
    out_ref[...] = jnp.dot(h2, w3_ref[...],
                           preferred_element_type=jnp.float32) + b3_ref[...]


def prepare_params(params, lane=LANE):
    """One-time prep: zero-pad the last layer on the lane axis so the kernel's
    output buffer is lane-dense (padded lanes produce zeros and are sliced off
    in the wrapper)."""
    w1, b1, w2, b2, w3, b3 = params
    a = w3.shape[1]
    a_pad = max(lane, pl.cdiv(a, lane) * lane)
    w3p = jnp.pad(w3, ((0, 0), (0, a_pad - a)))
    b3p = jnp.pad(b3, ((0, 0), (0, a_pad - a)))
    return (w1, b1, w2, b2, w3p, b3p)


def actor_forward(state, padded_params, action_dim, *, tile_b=128):
    """policy(state) for the Actor module.  Returns [B, action_dim] f32."""
    w1, b1, w2, b2, w3p, b3p = padded_params
    B, S = state.shape
    H = w1.shape[1]
    A_pad = w3p.shape[1]

    if B <= tile_b:
        # Single tile: block shape == full array dims is always legal.
        TB, B_pad = B, B
    else:
        TB = tile_b                      # multiple of 8 (sublane aligned)
        B_pad = pl.cdiv(B, TB) * TB

    x = state if B_pad == B else jnp.pad(state, ((0, B_pad - B), (0, 0)))
    grid = (B_pad // TB,)

    cost = pl.CostEstimate(
        flops=2 * B_pad * (S * H + H * H + H * A_pad),
        transcendentals=2 * B_pad * H,
        bytes_accessed=4 * (B_pad * S + S * H + H + H * H + H
                            + H * A_pad + A_pad + B_pad * A_pad),
    )

    def resident(shape):  # weights/biases: same block every grid step
        return pl.BlockSpec(shape, lambda i: (0, 0))

    out = pl.pallas_call(
        _actor_kernel,
        out_shape=jax.ShapeDtypeStruct((B_pad, A_pad), jnp.float32),
        grid=grid,
        in_specs=[
            pl.BlockSpec((TB, S), lambda i: (i, 0)),      # state tile
            resident((S, H)), resident((1, H)),           # w1, b1
            resident((H, H)), resident((1, H)),           # w2, b2
            resident((H, A_pad)), resident((1, A_pad)),   # w3 (lane-padded), b3
        ],
        out_specs=pl.BlockSpec((TB, A_pad), lambda i: (i, 0)),
        compiler_params=pltpu.CompilerParams(
            dimension_semantics=("parallel",)),
        cost_estimate=cost,
    )(x, w1, b1, w2, b2, w3p, b3p)

    return out[:B, :action_dim]


def init_params(key, state_dim, hidden_size, action_dim, zero_final=True):
    """PyTorch-default Linear init U(-1/sqrt(fan_in), 1/sqrt(fan_in)); the last
    layer is zero-filled when zero_final=True, matching the module's
    layers[-1].weight/bias.fill_(0)."""
    def linear(k, fan_in, fan_out):
        kw, kb = jax.random.split(k)
        bound = 1.0 / jnp.sqrt(fan_in)
        w = jax.random.uniform(kw, (fan_in, fan_out), jnp.float32, -bound, bound)
        b = jax.random.uniform(kb, (1, fan_out), jnp.float32, -bound, bound)
        return w, b

    k1, k2, k3 = jax.random.split(key, 3)
    w1, b1 = linear(k1, state_dim, hidden_size)
    w2, b2 = linear(k2, hidden_size, hidden_size)
    if zero_final:
        w3 = jnp.zeros((hidden_size, action_dim), jnp.float32)
        b3 = jnp.zeros((1, action_dim), jnp.float32)
    else:
        w3, b3 = linear(k3, hidden_size, action_dim)
    return (w1, b1, w2, b2, w3, b3)


def reference_forward(state, params):
    """Pure-JAX reference (same math as the PyTorch Sequential)."""
    w1, b1, w2, b2, w3, b3 = params
    h1 = jnp.tanh(state @ w1 + b1)
    h2 = jnp.tanh(h1 @ w2 + b2)
    return h2 @ w3 + b3


if __name__ == "__main__":
    hidden_size = 32
    state_dim = 3
    action_dim = 1
    batch = 2

    key = jax.random.PRNGKey(0)
    k_params, k_state = jax.random.split(key)
    state = jax.random.normal(k_state, (batch, state_dim), jnp.float32)

    # 1) Module-faithful init (final layer zeroed, as in the PyTorch spec).
    params = init_params(k_params, state_dim, hidden_size, action_dim,
                         zero_final=True)
    out = jax.block_until_ready(
        actor_forward(state, prepare_params(params), action_dim))
    ref = reference_forward(state, params)
    assert out.shape == (batch, action_dim)
    assert jnp.allclose(out, ref, atol=1e-5, rtol=1e-5)

    # 2) Non-zero final layer to actually exercise the full kernel math.
    params_nz = init_params(k_params, state_dim, hidden_size, action_dim,
                            zero_final=False)
    padded_nz = prepare_params(params_nz)
    out_nz = jax.block_until_ready(actor_forward(state, padded_nz, action_dim))
    ref_nz = reference_forward(state, params_nz)
    assert jnp.allclose(out_nz, ref_nz, atol=1e-5, rtol=1e-5)

    # 3) Larger batch exercises the multi-tile grid path (resident weights,
    #    parallel batch axis, batch padding + wrapper slice).
    big_state = jax.random.normal(k_state, (300, state_dim), jnp.float32)
    out_big = jax.block_until_ready(
        actor_forward(big_state, padded_nz, action_dim))
    ref_big = reference_forward(big_state, params_nz)
    assert out_big.shape == (300, action_dim)
    assert jnp.allclose(out_big, ref_big, atol=1e-4, rtol=1e-4)

    print("KERNEL_OK")
</pallas_src>

<mosaic_0001>
module attributes {stable_mosaic.version = 11 : i64} {
  func.func @_actor_kernel(%arg0: i32, %arg1: memref<2x3xf32, #tpu.memory_space<vmem>>, %arg2: memref<3x32xf32, #tpu.memory_space<vmem>>, %arg3: memref<1x32xf32, #tpu.memory_space<vmem>>, %arg4: memref<32x32xf32, #tpu.memory_space<vmem>>, %arg5: memref<1x32xf32, #tpu.memory_space<vmem>>, %arg6: memref<32x128xf32, #tpu.memory_space<vmem>>, %arg7: memref<1x128xf32, #tpu.memory_space<vmem>>, %arg8: memref<2x128xf32, #tpu.memory_space<vmem>>) attributes {dimension_semantics = [#tpu.dimension_semantics<parallel>], iteration_bounds = array<i64: 1>, scalar_prefetch = 0 : i64, scratch_operands = 0 : i64, tpu.core_type = #tpu.core_type<tc>, window_params = [{transform_indices = @transform_0, window_bounds = array<i64: 2, 3>}, {pipeline_mode = #tpu.pipeline_mode<synchronous>, transform_indices = @transform_1, window_bounds = array<i64: 3, 32>}, {pipeline_mode = #tpu.pipeline_mode<synchronous>, transform_indices = @transform_2, window_bounds = array<i64: 1, 32>}, {pipeline_mode = #tpu.pipeline_mode<synchronous>, transform_indices = @transform_3, window_bounds = array<i64: 32, 32>}, {pipeline_mode = #tpu.pipeline_mode<synchronous>, transform_indices = @transform_4, window_bounds = array<i64: 1, 32>}, {pipeline_mode = #tpu.pipeline_mode<synchronous>, transform_indices = @transform_5, window_bounds = array<i64: 32, 128>}, {pipeline_mode = #tpu.pipeline_mode<synchronous>, transform_indices = @transform_6, window_bounds = array<i64: 1, 128>}, {transform_indices = @transform_7, window_bounds = array<i64: 2, 128>}]} {
    %c0 = arith.constant 0 : index
    %c0_0 = arith.constant 0 : index
    %0 = vector.load %arg1[%c0, %c0_0] : memref<2x3xf32, #tpu.memory_space<vmem>>, vector<2x3xf32>
    %c0_1 = arith.constant 0 : index
    %c0_2 = arith.constant 0 : index
    %1 = vector.load %arg2[%c0_1, %c0_2] : memref<3x32xf32, #tpu.memory_space<vmem>>, vector<3x32xf32>
    %cst = arith.constant dense<0.000000e+00> : vector<2x32xf32>
    %2 = tpu.matmul %0, %1, %cst {dimension_numbers = #tpu.dot_dimension_numbers<[1], [0], [0], [1], [0, 0, 1, 1], [], []>} : vector<2x3xf32>, vector<3x32xf32>, vector<2x32xf32> -> vector<2x32xf32>
    %c0_3 = arith.constant 0 : index
    %c0_4 = arith.constant 0 : index
    %3 = vector.load %arg3[%c0_3, %c0_4] : memref<1x32xf32, #tpu.memory_space<vmem>>, vector<1x32xf32>
    %4 = vector.broadcast %3 : vector<1x32xf32> to vector<2x32xf32>
    %5 = arith.addf %2, %4 : vector<2x32xf32>
    %6 = math.tanh %5 : vector<2x32xf32>
    %c0_5 = arith.constant 0 : index
    %c0_6 = arith.constant 0 : index
    %7 = vector.load %arg4[%c0_5, %c0_6] : memref<32x32xf32, #tpu.memory_space<vmem>>, vector<32x32xf32>
    %cst_7 = arith.constant dense<0.000000e+00> : vector<2x32xf32>
    %8 = tpu.matmul %6, %7, %cst_7 {dimension_numbers = #tpu.dot_dimension_numbers<[1], [0], [0], [1], [0, 0, 1, 1], [], []>} : vector<2x32xf32>, vector<32x32xf32>, vector<2x32xf32> -> vector<2x32xf32>
    %c0_8 = arith.constant 0 : index
    %c0_9 = arith.constant 0 : index
    %9 = vector.load %arg5[%c0_8, %c0_9] : memref<1x32xf32, #tpu.memory_space<vmem>>, vector<1x32xf32>
    %10 = vector.broadcast %9 : vector<1x32xf32> to vector<2x32xf32>
    %11 = arith.addf %8, %10 : vector<2x32xf32>
    %12 = math.tanh %11 : vector<2x32xf32>
    %c0_10 = arith.constant 0 : index
    %c0_11 = arith.constant 0 : index
    %13 = vector.load %arg6[%c0_10, %c0_11] : memref<32x128xf32, #tpu.memory_space<vmem>>, vector<32x128xf32>
    %cst_12 = arith.constant dense<0.000000e+00> : vector<2x128xf32>
    %14 = tpu.matmul %12, %13, %cst_12 {dimension_numbers = #tpu.dot_dimension_numbers<[1], [0], [0], [1], [0, 0, 1, 1], [], []>} : vector<2x32xf32>, vector<32x128xf32>, vector<2x128xf32> -> vector<2x128xf32>
    %c0_13 = arith.constant 0 : index
    %c0_14 = arith.constant 0 : index
    %15 = vector.load %arg7[%c0_13, %c0_14] : memref<1x128xf32, #tpu.memory_space<vmem>>, vector<1x128xf32>
    %16 = vector.broadcast %15 : vector<1x128xf32> to vector<2x128xf32>
    %17 = arith.addf %14, %16 : vector<2x128xf32>
    %c0_15 = arith.constant 0 : index
    %c0_16 = arith.constant 0 : index
    %18 = vector.load %arg8[%c0_15, %c0_16] : memref<2x128xf32, #tpu.memory_space<vmem>>, vector<2x128xf32>
    tpu.vector_store %arg8[%c0_15, %c0_16], %17 {strides = array<i32>} : memref<2x128xf32, #tpu.memory_space<vmem>>, vector<2x128xf32>,
    return
  }
  func.func @transform_0(%arg0: i32) -> (i32, i32) {
    %c0_i32 = arith.constant 0 : i32
    %c0_i32_0 = arith.constant 0 : i32
    return %arg0, %c0_i32 : i32, i32
  }
  func.func @transform_1(%arg0: i32) -> (i32, i32) {
    %c0_i32 = arith.constant 0 : i32
    %c0_i32_0 = arith.constant 0 : i32
    %c0_i32_1 = arith.constant 0 : i32
    return %c0_i32, %c0_i32_0 : i32, i32
  }
  func.func @transform_2(%arg0: i32) -> (i32, i32) {
    %c0_i32 = arith.constant 0 : i32
    %c0_i32_0 = arith.constant 0 : i32
    %c0_i32_1 = arith.constant 0 : i32
    return %c0_i32, %c0_i32_0 : i32, i32
  }
  func.func @transform_3(%arg0: i32) -> (i32, i32) {
    %c0_i32 = arith.constant 0 : i32
    %c0_i32_0 = arith.constant 0 : i32
    %c0_i32_1 = arith.constant 0 : i32
    return %c0_i32, %c0_i32_0 : i32, i32
  }
  func.func @transform_4(%arg0: i32) -> (i32, i32) {
    %c0_i32 = arith.constant 0 : i32
    %c0_i32_0 = arith.constant 0 : i32
    %c0_i32_1 = arith.constant 0 : i32
    return %c0_i32, %c0_i32_0 : i32, i32
  }
  func.func @transform_5(%arg0: i32) -> (i32, i32) {
    %c0_i32 = arith.constant 0 : i32
    %c0_i32_0 = arith.constant 0 : i32
    %c0_i32_1 = arith.constant 0 : i32
    return %c0_i32, %c0_i32_0 : i32, i32
  }
  func.func @transform_6(%arg0: i32) -> (i32, i32) {
    %c0_i32 = arith.constant 0 : i32
    %c0_i32_0 = arith.constant 0 : i32
    %c0_i32_1 = arith.constant 0 : i32
    return %c0_i32, %c0_i32_0 : i32, i32
  }
  func.func @transform_7(%arg0: i32) -> (i32, i32) {
    %c0_i32 = arith.constant 0 : i32
    %c0_i32_0 = arith.constant 0 : i32
    return %arg0, %c0_i32 : i32, i32
  }
}

</mosaic_0001>

<llo_original>
// kernel: tpu_custom_call.1
$region0: #{tpu_custom_call.1}
  #allocation0 [shape = 'u32[]', space=smem, size = 0x4, offset = 0x4, fixed_abs, tag = 'smem constant byte address 0x4 - core index']
  #allocation1 [shape = 'u32[144,128]{1,0:T(1,128)}', space=vmem, size = 0x12000, scoped, tag = 'internal scratch']
  %s0 = inlined_call_operand.hbm [shape: f32[2,3], index: 0, kind: input, shape index: {}]
  %s1 = inlined_call_operand.hbm [shape: f32[3,32], index: 1, kind: input, shape index: {}]
  %s2 = inlined_call_operand.vmem [shape: f32[1,32], index: 2, kind: input, shape index: {}]
  %s3 = inlined_call_operand.hbm [shape: f32[32,32], index: 3, kind: input, shape index: {}]
  %s4 = inlined_call_operand.vmem [shape: f32[1,32], index: 4, kind: input, shape index: {}]
  %s5 = inlined_call_operand.hbm [shape: f32[32,128], index: 5, kind: input, shape index: {}]
  %s6 = inlined_call_operand.vmem [shape: f32[1,128], index: 6, kind: input, shape index: {}]
  %s7 = inlined_call_operand.hbm [shape: f32[2,128], index: 7, kind: output, shape index: {}]
  %s8 = sld [smem:[#allocation0]]
  $region54: #{tpu_custom_call.1} parent=0
    _
  %s10 = ssub.s32 1, %s8
  %s11 = scalar_select 0, %s10, %s8
  $region1: #{tpu_custom_call.1} parent=0
    #allocation2 [shape = 'u8[1024]{0}', space=vmem, size = 0x400, scoped, tag = 'input window, operand 0, single buffered']
    #allocation3 [shape = 's32[1]{0}', space=sflag, size = 0x4, scoped, tag = 'scoped memory for tpu_custom_call.1']
    #allocation4 [shape = 's32[1]{0}', space=sflag, size = 0x4, scoped, tag = 'scoped memory for tpu_custom_call.1']
    #allocation5 [shape = 'u8[2048]{0}', space=vmem, size = 0x800, scoped, tag = 'input window, operand 1, single buffered']
    #allocation6 [shape = 's32[1]{0}', space=sflag, size = 0x4, scoped, tag = 'scoped memory for tpu_custom_call.1']
    #allocation7 [shape = 'u8[16384]{0}', space=vmem, size = 0x4000, scoped, tag = 'input window, operand 3, single buffered']
    #allocation8 [shape = 'u8[16384]{0}', space=vmem, size = 0x4000, scoped, tag = 'input window, operand 5, single buffered']
    #allocation9 [shape = 's32[1]{0}', space=sflag, size = 0x4, scoped, tag = 'scoped memory for tpu_custom_call.1']
    #allocation10 [shape = 'u8[1024]{0}', space=vmem, size = 0x400, scoped, tag = 'output window, operand 0, single buffered']
    %12 = vsyncpa [#allocation3], 0
    %13 = vsyncpa [#allocation6], 0
    %14 = vsyncpa [#allocation9], 0
    %15 = vsyncpa [#allocation4], 0
    // Predicated region
    $region2: #{tpu_custom_call.1} parent=1 // pred_check
      _
    $region3: #{tpu_custom_call.1} parent=1 // pred_check_branch
      %17 = sbr.rel (0) target = $region5
    $region4: #{tpu_custom_call.1} parent=1 // pred_region
      %s19 = ssub.s32 32, 32
      %20 = vsyncadd [#allocation3], %s19
      %s22 = sshll.u32 [#allocation2], 4
      %s23 = int_to_ptr.vmem [resolvable:$true] %s22
      %25 = dma.hbm_to_vmem [thread:$0]  %s0, 32, %s23, [#allocation3]
    $region5: #{tpu_custom_call.1} parent=1 // pred_fallthru
      _
    // Predicated region
    $region6: #{tpu_custom_call.1} parent=1 // pred_check
      _
    $region7: #{tpu_custom_call.1} parent=1 // pred_check_branch
      %27 = sbr.rel (0) target = $region9
    $region8: #{tpu_custom_call.1} parent=1 // pred_region
      %s29 = ssub.s32 64, 64
      %30 = vsyncadd [#allocation6], %s29
      %s32 = sshll.u32 [#allocation5], 4
      %s33 = int_to_ptr.vmem [resolvable:$true] %s32
      %35 = dma.hbm_to_vmem [thread:$0]  %s1, 64, %s33, [#allocation6]
    $region9: #{tpu_custom_call.1} parent=1 // pred_fallthru
      _
    // Predicated region
    $region10: #{tpu_custom_call.1} parent=1 // pred_check
      _
    $region11: #{tpu_custom_call.1} parent=1 // pred_check_branch
      %37 = sbr.rel (0) target = $region13
    $region12: #{tpu_custom_call.1} parent=1 // pred_region
      _
    $region13: #{tpu_custom_call.1} parent=1 // pred_fallthru
      _
    // Predicated region
    $region14: #{tpu_custom_call.1} parent=1 // pred_check
      _
    $region15: #{tpu_custom_call.1} parent=1 // pred_check_branch
      %39 = sbr.rel (0) target = $region17
    $region16: #{tpu_custom_call.1} parent=1 // pred_region
      %s41 = ssub.s32 512, 512
      %42 = vsyncadd [#allocation6], %s41
      %s43 = sshll.u32 [#allocation7], 4
      %s44 = int_to_ptr.vmem [resolvable:$true] %s43
      %49 = dma.hbm_to_vmem [thread:$0]  %s3, 512, %s44, [#allocation6], 128, 128, 8
    $region17: #{tpu_custom_call.1} parent=1 // pred_fallthru
      _
    // Predicated region
    $region18: #{tpu_custom_call.1} parent=1 // pred_check
      _
    $region19: #{tpu_custom_call.1} parent=1 // pred_check_branch
      %51 = sbr.rel (0) target = $region21
    $region20: #{tpu_custom_call.1} parent=1 // pred_region
      _
    $region21: #{tpu_custom_call.1} parent=1 // pred_fallthru
      _
    // Predicated region
    $region22: #{tpu_custom_call.1} parent=1 // pred_check
      _
    $region23: #{tpu_custom_call.1} parent=1 // pred_check_branch
      %53 = sbr.rel (0) target = $region25
    $region24: #{tpu_custom_call.1} parent=1 // pred_region
      %s55 = ssub.s32 512, 512
      %56 = vsyncadd [#allocation9], %s55
      %s57 = sshll.u32 [#allocation8], 4
      %s58 = int_to_ptr.vmem [resolvable:$true] %s57
      %63 = dma.hbm_to_vmem [thread:$0]  %s5, 512, %s58, [#allocation9], 128, 128, 8
    $region25: #{tpu_custom_call.1} parent=1 // pred_fallthru
      _
    // Predicated region
    $region26: #{tpu_custom_call.1} parent=1 // pred_check
      _
    $region27: #{tpu_custom_call.1} parent=1 // pred_check_branch
      %65 = sbr.rel (0) target = $region29
    $region28: #{tpu_custom_call.1} parent=1 // pred_region
      _
    $region29: #{tpu_custom_call.1} parent=1 // pred_fallthru
      _
    // Predicated region
    $region30: #{tpu_custom_call.1} parent=1 // pred_check
      _
    $region31: #{tpu_custom_call.1} parent=1 // pred_check_branch
      %67 = sbr.rel (0) target = $region33
    $region32: #{tpu_custom_call.1} parent=1 // pred_region
      %68 = dma.done [#allocation3], 32
    $region33: #{tpu_custom_call.1} parent=1 // pred_fallthru
      _
    // Predicated region
    $region34: #{tpu_custom_call.1} parent=1 // pred_check
      _
    $region35: #{tpu_custom_call.1} parent=1 // pred_check_branch
      %70 = sbr.rel (0) target = $region37
    $region36: #{tpu_custom_call.1} parent=1 // pred_region
      %71 = dma.done [#allocation6], 64
    $region37: #{tpu_custom_call.1} parent=1 // pred_fallthru
      _
    // Predicated region
    $region38: #{tpu_custom_call.1} parent=1 // pred_check
      _
    $region39: #{tpu_custom_call.1} parent=1 // pred_check_branch
      %73 = sbr.rel (0) target = $region41
    $region40: #{tpu_custom_call.1} parent=1 // pred_region
      %74 = dma.done [#allocation6], 512
    $region41: #{tpu_custom_call.1} parent=1 // pred_fallthru
      _
    // Predicated region
    $region42: #{tpu_custom_call.1} parent=1 // pred_check
      _
    $region43: #{tpu_custom_call.1} parent=1 // pred_check_branch
      %76 = sbr.rel (0) target = $region45
    $region44: #{tpu_custom_call.1} parent=1 // pred_region
      %77 = dma.done [#allocation9], 512
    $region45: #{tpu_custom_call.1} parent=1 // pred_fallthru
      _
    %v78 = vld [vmem:[#allocation2] sm:$0x3]
    %v79 = vld [vmem:[#allocation5] sm:$0x7]
    %v80 = vld [vmem:[%s2] sm:$0x1]
    %v82 = vlaneseq
    %v83 = vshrl.u32 %v82, 7
    %v84 = vsub.s32 0, %v83
    %v85 = vrot.slane %v80, %v84
    %vm87 = vcmask 23552
    %v89 = vsel %vm87, %v78, 0
    %vm91 = vcmask 1042432
    %v93 = vsel %vm91, %v79, 0
    %95 = vmatprep.subr.mxu0 0.0
    %96 = vmatpush1.msra.mxu0 %v93
    %97 = vmatprep.subr.mxu0 0.0
    %98 = vmatpush1.msra.mxu0 0.0
    %99 = vmatprep.subr.mxu0 0.0
    %100 = vmatpush1.msra.mxu0 0.0
    %101 = vmatprep.subr.mxu0 0.0
    %102 = vmatpush1.msra.mxu0 0.0
    %103 = vmatprep.subr.mxu0 0.0
    %104 = vmatpush1.msra.mxu0 0.0
    %105 = vmatprep.subr.mxu0 0.0
    %106 = vmatpush1.msra.mxu0 0.0
    %107 = vmatprep.subr.mxu0 0.0
    %108 = vmatpush1.msra.mxu0 0.0
    %109 = vmatprep.subr.mxu0 0.0
    %110 = vmatpush1.msra.mxu0 0.0
    %111 = vmatprep.subr.mxu0 0.0
    %112 = vmatpush1.msra.mxu0 0.0
    %113 = vmatprep.subr.mxu0 0.0
    %114 = vmatpush1.msra.mxu0 0.0
    %115 = vmatprep.subr.mxu0 0.0
    %116 = vmatpush1.msra.mxu0 0.0
    %117 = vmatprep.subr.mxu0 0.0
    %118 = vmatpush1.msra.mxu0 0.0
    %119 = vmatprep.subr.mxu0 0.0
    %120 = vmatpush1.msra.mxu0 0.0
    %121 = vmatprep.subr.mxu0 0.0
    %122 = vmatpush1.msra.mxu0 0.0
    %123 = vmatprep.subr.mxu0 0.0
    %124 = vmatpush1.msra.mxu0 0.0
    %125 = vmatprep.subr.mxu0 0.0
    %126 = vmatpush1.msra.mxu0 0.0
    %127 = vmatprep.subr.mxu0 0.0
    %128 = vmatpush1.msra.mxu0 0.0
    %129 = vmatprep.subr.mxu0 0.0
    %130 = vmatpush1.msra.mxu0 0.0
    %131 = vmatprep.subr.mxu0 0.0
    %132 = vmatpush1.msra.mxu0 0.0
    %133 = vmatprep.subr.mxu0 0.0
    %134 = vmatpush1.msra.mxu0 0.0
    %135 = vmatprep.subr.mxu0 0.0
    %136 = vmatpush1.msra.mxu0 0.0
    %137 = vmatprep.subr.mxu0 0.0
    %138 = vmatpush1.msra.mxu0 0.0
    %139 = vmatprep.subr.mxu0 0.0
    %140 = vmatpush1.msra.mxu0 0.0
    %141 = vmatprep.subr.mxu0 0.0
    %142 = vmatpush1.msra.mxu0 0.0
    %143 = vmatprep.subr.mxu0 0.0
    %144 = vmatpush1.msra.mxu0 0.0
    %145 = vmatprep.subr.mxu0 0.0
    %146 = vmatpush1.msra.mxu0 0.0
    %147 = vmatprep.subr.mxu0 0.0
    %148 = vmatpush1.msra.mxu0 0.0
    %149 = vmatprep.subr.mxu0 0.0
    %150 = vmatpush1.msra.mxu0 0.0
    %151 = vmatprep.subr.mxu0 0.0
    %152 = vmatpush1.msra.mxu0 0.0
    %153 = vmatprep.subr.mxu0 0.0
    %154 = vmatpush1.msra.mxu0 0.0
    %155 = vmatprep.subr.mxu0 0.0
    %156 = vmatpush1.msra.mxu0 0.0
    %157 = vmatprep.subr.mxu0 0.0
    %158 = vmatpush1.msra.mxu0 0.0
    %159 = vmatprep.mubr.f32.mxu0 0.0
    %160 = vmatmul.mubr.f32.gmra.mrb[0].mxu0 %v89
    %v161 = vpop.f32.mrb[0].mxu0
    %v162 = vadd.f32 %v85, %v161
    %v163 = vpop.f32.mrb[0].mxu0
    %164 = vdwg.mxu0
    %v165 = vtanh.pop %v162
    %v166 = vld [vmem:[#allocation7] sm:$0xff]
    %v167 = vld [vmem:[#allocation7 + $0x8] sm:$0xff]
    %v168 = vld [vmem:[#allocation7 + $0x10] sm:$0xff]
    %v169 = vld [vmem:[#allocation7 + $0x18] sm:$0xff]
    %v170 = vld [vmem:[%s4] sm:$0x1]
    %v172 = vlaneseq
    %v173 = vshrl.u32 %v172, 7
    %v174 = vsub.s32 0, %v173
    %v175 = vrot.slane %v170, %v174
    %vm177 = vcmask 261120
    %v179 = vsel %vm177, %v165, 0
    %181 = vmatprep.subr.mxu0 0.0
    %182 = vmatpush1.msra.mxu0 %v166
    %183 = vmatprep.subr.mxu0 0.0
    %184 = vmatpush1.msra.mxu0 %v167
    %185 = vmatprep.subr.mxu0 0.0
    %186 = vmatpush1.msra.mxu0 %v168
    %187 = vmatprep.subr.mxu0 0.0
    %188 = vmatpush1.msra.mxu0 %v169
    %189 = vmatprep.subr.mxu0 0.0
    %190 = vmatpush1.msra.mxu0 0.0
    %191 = vmatprep.subr.mxu0 0.0
    %192 = vmatpush1.msra.mxu0 0.0
    %193 = vmatprep.subr.mxu0 0.0
    %194 = vmatpush1.msra.mxu0 0.0
    %195 = vmatprep.subr.mxu0 0.0
    %196 = vmatpush1.msra.mxu0 0.0
    %197 = vmatprep.subr.mxu0 0.0
    %198 = vmatpush1.msra.mxu0 0.0
    %199 = vmatprep.subr.mxu0 0.0
    %200 = vmatpush1.msra.mxu0 0.0
    %201 = vmatprep.subr.mxu0 0.0
    %202 = vmatpush1.msra.mxu0 0.0
    %203 = vmatprep.subr.mxu0 0.0
    %204 = vmatpush1.msra.mxu0 0.0
    %205 = vmatprep.subr.mxu0 0.0
    %206 = vmatpush1.msra.mxu0 0.0
    %207 = vmatprep.subr.mxu0 0.0
    %208 = vmatpush1.msra.mxu0 0.0
    %209 = vmatprep.subr.mxu0 0.0
    %210 = vmatpush1.msra.mxu0 0.0
    %211 = vmatprep.subr.mxu0 0.0
    %212 = vmatpush1.msra.mxu0 0.0
    %213 = vmatprep.subr.mxu0 0.0
    %214 = vmatpush1.msra.mxu0 0.0
    %215 = vmatprep.subr.mxu0 0.0
    %216 = vmatpush1.msra.mxu0 0.0
    %217 = vmatprep.subr.mxu0 0.0
    %218 = vmatpush1.msra.mxu0 0.0
    %219 = vmatprep.subr.mxu0 0.0
    %220 = vmatpush1.msra.mxu0 0.0
    %221 = vmatprep.subr.mxu0 0.0
    %222 = vmatpush1.msra.mxu0 0.0
    %223 = vmatprep.subr.mxu0 0.0
    %224 = vmatpush1.msra.mxu0 0.0
    %225 = vmatprep.subr.mxu0 0.0
    %226 = vmatpush1.msra.mxu0 0.0
    %227 = vmatprep.subr.mxu0 0.0
    %228 = vmatpush1.msra.mxu0 0.0
    %229 = vmatprep.subr.mxu0 0.0
    %230 = vmatpush1.msra.mxu0 0.0
    %231 = vmatprep.subr.mxu0 0.0
    %232 = vmatpush1.msra.mxu0 0.0
    %233 = vmatprep.subr.mxu0 0.0
    %234 = vmatpush1.msra.mxu0 0.0
    %235 = vmatprep.subr.mxu0 0.0
    %236 = vmatpush1.msra.mxu0 0.0
    %237 = vmatprep.subr.mxu0 0.0
    %238 = vmatpush1.msra.mxu0 0.0
    %239 = vmatprep.subr.mxu0 0.0
    %240 = vmatpush1.msra.mxu0 0.0
    %241 = vmatprep.subr.mxu0 0.0
    %242 = vmatpush1.msra.mxu0 0.0
    %243 = vmatprep.subr.mxu0 0.0
    %244 = vmatpush1.msra.mxu0 0.0
    %245 = vmatprep.mubr.f32.mxu0 0.0
    %246 = vmatmul.mubr.f32.gmra.mrb[0].mxu0 %v179
    %v247 = vpop.f32.mrb[0].mxu0
    %v248 = vadd.f32 %v175, %v247
    %v249 = vpop.f32.mrb[0].mxu0
    %250 = vdwg.mxu0
    %v251 = vtanh.pop %v248
    %v252 = vld [vmem:[#allocation8] sm:$0xff]
    %v253 = vld [vmem:[#allocation8 + $0x8] sm:$0xff]
    %v254 = vld [vmem:[#allocation8 + $0x10] sm:$0xff]
    %v255 = vld [vmem:[#allocation8 + $0x18] sm:$0xff]
    %v256 = vld [vmem:[%s6] sm:$0x1]
    %v258 = vlaneseq
    %v259 = vshrl.u32 %v258, 7
    %v260 = vsub.s32 0, %v259
    %v261 = vrot.slane %v256, %v260
    %v264 = vsel %vm177, %v251, 0
    %266 = vmatprep.subr.mxu0 0.0
    %267 = vmatpush1.msra.mxu0 %v252
    %268 = vmatprep.subr.mxu0 0.0
    %269 = vmatpush1.msra.mxu0 %v253
    %270 = vmatprep.subr.mxu0 0.0
    %271 = vmatpush1.msra.mxu0 %v254
    %272 = vmatprep.subr.mxu0 0.0
    %273 = vmatpush1.msra.mxu0 %v255
    %274 = vmatprep.subr.mxu0 0.0
    %275 = vmatpush1.msra.mxu0 0.0
    %276 = vmatprep.subr.mxu0 0.0
    %277 = vmatpush1.msra.mxu0 0.0
    %278 = vmatprep.subr.mxu0 0.0
    %279 = vmatpush1.msra.mxu0 0.0
    %280 = vmatprep.subr.mxu0 0.0
    %281 = vmatpush1.msra.mxu0 0.0
    %282 = vmatprep.subr.mxu0 0.0
    %283 = vmatpush1.msra.mxu0 0.0
    %284 = vmatprep.subr.mxu0 0.0
    %285 = vmatpush1.msra.mxu0 0.0
    %286 = vmatprep.subr.mxu0 0.0
    %287 = vmatpush1.msra.mxu0 0.0
    %288 = vmatprep.subr.mxu0 0.0
    %289 = vmatpush1.msra.mxu0 0.0
    %290 = vmatprep.subr.mxu0 0.0
    %291 = vmatpush1.msra.mxu0 0.0
    %292 = vmatprep.subr.mxu0 0.0
    %293 = vmatpush1.msra.mxu0 0.0
    %294 = vmatprep.subr.mxu0 0.0
    %295 = vmatpush1.msra.mxu0 0.0
    %296 = vmatprep.subr.mxu0 0.0
    %297 = vmatpush1.msra.mxu0 0.0
    %298 = vmatprep.subr.mxu0 0.0
    %299 = vmatpush1.msra.mxu0 0.0
    %300 = vmatprep.subr.mxu0 0.0
    %301 = vmatpush1.msra.mxu0 0.0
    %302 = vmatprep.subr.mxu0 0.0
    %303 = vmatpush1.msra.mxu0 0.0
    %304 = vmatprep.subr.mxu0 0.0
    %305 = vmatpush1.msra.mxu0 0.0
    %306 = vmatprep.subr.mxu0 0.0
    %307 = vmatpush1.msra.mxu0 0.0
    %308 = vmatprep.subr.mxu0 0.0
    %309 = vmatpush1.msra.mxu0 0.0
    %310 = vmatprep.subr.mxu0 0.0
    %311 = vmatpush1.msra.mxu0 0.0
    %312 = vmatprep.subr.mxu0 0.0
    %313 = vmatpush1.msra.mxu0 0.0
    %314 = vmatprep.subr.mxu0 0.0
    %315 = vmatpush1.msra.mxu0 0.0
    %316 = vmatprep.subr.mxu0 0.0
    %317 = vmatpush1.msra.mxu0 0.0
    %318 = vmatprep.subr.mxu0 0.0
    %319 = vmatpush1.msra.mxu0 0.0
    %320 = vmatprep.subr.mxu0 0.0
    %321 = vmatpush1.msra.mxu0 0.0
    %322 = vmatprep.subr.mxu0 0.0
    %323 = vmatpush1.msra.mxu0 0.0
    %324 = vmatprep.subr.mxu0 0.0
    %325 = vmatpush1.msra.mxu0 0.0
    %326 = vmatprep.subr.mxu0 0.0
    %327 = vmatpush1.msra.mxu0 0.0
    %328 = vmatprep.subr.mxu0 0.0
    %329 = vmatpush1.msra.mxu0 0.0
    %330 = vmatprep.mubr.f32.mxu0 0.0
    %331 = vmatmul.mubr.f32.gmra.mrb[0].mxu0 %v264
    %v332 = vpop.f32.mrb[0].mxu0
    %v333 = vadd.f32 %v261, %v332
    %v334 = vpop.f32.mrb[0].mxu0
    %335 = vdwg.mxu0
    %336 = vst [vmem:[#allocation10] sm:$0x3] %v333
    // Predicated region
    $region46: #{tpu_custom_call.1} parent=1 // pred_check
      _
    $region47: #{tpu_custom_call.1} parent=1 // pred_check_branch
      %338 = sbr.rel (0) target = $region49
    $region48: #{tpu_custom_call.1} parent=1 // pred_region
      %s340 = ssub.s32 32, 32
      %341 = vsyncadd [#allocation4], %s340
      %s343 = sshll.u32 [#allocation10], 4
      %s344 = int_to_ptr.vmem [resolvable:$true] %s343
      %346 = dma.vmem_to_hbm [thread:$0]  %s344, 32, %s7, [#allocation4]
    $region49: #{tpu_custom_call.1} parent=1 // pred_fallthru
      _
    // Predicated region
    $region50: #{tpu_custom_call.1} parent=1 // pred_check
      _
    $region51: #{tpu_custom_call.1} parent=1 // pred_check_branch
      %348 = sbr.rel (0) target = $region53
    $region52: #{tpu_custom_call.1} parent=1 // pred_region
      %349 = dma.done [#allocation4], 32
    $region53: #{tpu_custom_call.1} parent=1 // pred_fallthru
      _
    %350 = vsyncpa [#allocation3], 1
    %351 = vsyncpa [#allocation6], 1
    %352 = vsyncpa [#allocation9], 1
    %353 = vsyncpa [#allocation4], 1

</llo_original>
